<compile_context>
chip_gen: v7x
topology: tpu7x:2x2x1
jax: 0.10.0
libtpu: 0.0.40
codegen_flags: <defaults>
</compile_context>

<pallas_src>
import functools

import jax
import jax.numpy as jnp
from jax import lax
from jax.experimental import pallas as pl
from jax.experimental.pallas import tpu as pltpu

LANE = 128  # TPU vreg lane width


def _round_up(x, m):
    return (x + m - 1) // m * m


# ---------------------------------------------------------------------------
# Kernel 1: fused MLP trunk (per batch tile).
#   head[:, 0:A]  = advantage logits
#   head[:, A]    = value
#   head[:, A+1:] = zero padding (lane-dense output)
# ---------------------------------------------------------------------------
def _mlp_trunk_kernel(x_ref, w1_ref, b1_ref, wb_ref, bb_ref, wh_ref, bh_ref,
                      head_ref):
    # Cast activations to bf16 right before each MXU op; accumulate in f32.
    x = x_ref[...].astype(jnp.bfloat16)

    feat = jnp.dot(x, w1_ref[...], preferred_element_type=jnp.float32)
    feat = jnp.maximum(feat + b1_ref[...], 0.0)

    # One fused matmul for both hidden branches (adv | value) -> 128 lanes.
    branch = jnp.dot(feat.astype(jnp.bfloat16), wb_ref[...],
                     preferred_element_type=jnp.float32)
    branch = jnp.maximum(branch + bb_ref[...], 0.0)

    # One fused, zero-padded matmul for both output heads -> 128 lanes.
    head = jnp.dot(branch.astype(jnp.bfloat16), wh_ref[...],
                   preferred_element_type=jnp.float32)
    head_ref[...] = head + bh_ref[...]


# ---------------------------------------------------------------------------
# Kernel 2: dueling combine with the module's GLOBAL advantage mean.
# Runs as a single grid step over the whole (padded) batch (the head tensor is
# tiny: B_pad x 128 f32).  Padded rows / padded lanes are masked out of the mean.
# ---------------------------------------------------------------------------
def _combine_kernel(head_ref, q_ref, *, action_size, n_valid):
    head = head_ref[...]                                     # (B_pad, 128) f32
    rows = lax.broadcasted_iota(jnp.int32, head.shape, 0)
    cols = lax.broadcasted_iota(jnp.int32, head.shape, 1)
    adv_mask = (rows < n_valid) & (cols < action_size)
    adv_sum = jnp.sum(jnp.where(adv_mask, head, 0.0))
    adv_mean = adv_sum * (1.0 / float(n_valid * action_size))  # hoisted constant
    val = head[:, action_size:action_size + 1]                 # (B_pad, 1)
    # Lane-dense write; only columns [0:action_size] are meaningful.
    q_ref[...] = head + val + adv_mean


# ---------------------------------------------------------------------------
# Host-side parameter fusion (feedback items: fuse branches, fuse heads, bf16).
# ---------------------------------------------------------------------------
def fuse_params(params):
    fc2 = params["wa"].shape[1]
    A = params["wao"].shape[1]
    assert A + 1 <= LANE, "action_size + 1 must fit in 128 lanes"

    w_branch = jnp.concatenate([params["wa"], params["wv"]], axis=1)   # (fc1, 2*fc2)
    b_branch = jnp.concatenate([params["ba"], params["bv"]], axis=1)   # (1, 2*fc2)

    w_head = jnp.zeros((2 * fc2, LANE), jnp.float32)
    w_head = w_head.at[:fc2, :A].set(params["wao"])          # advantage head
    w_head = w_head.at[fc2:, A].set(params["wvo"][:, 0])     # value head in col A
    b_head = jnp.zeros((1, LANE), jnp.float32)
    b_head = b_head.at[0, :A].set(params["bao"][0])
    b_head = b_head.at[0, A].set(params["bvo"][0, 0])

    # Weights -> bf16 (MXU native, half the DMA); biases stay f32 so the
    # bias-add / ReLU stay on the f32 VPU path (v5e has no bf16 VPU).
    return dict(
        w1=params["w1"].astype(jnp.bfloat16),
        b1=params["b1"],
        w_branch=w_branch.astype(jnp.bfloat16),
        b_branch=b_branch,
        w_head=w_head.astype(jnp.bfloat16),
        b_head=b_head,
    )


# ---------------------------------------------------------------------------
# Forward wrapper.
# ---------------------------------------------------------------------------
@functools.partial(jax.jit, static_argnames=("action_size", "tile_b"))
def dual_qnetwork_forward(state, fused, *, action_size, tile_b=128):
    B, S = state.shape
    A = action_size
    fc1 = fused["w1"].shape[1]
    h2 = fused["w_branch"].shape[1]        # 2 * fc2

    # Pick batch tile; pad batch to a multiple of it (padded rows are masked
    # out of the global mean in kernel 2 and sliced off at the end).
    tile_b = min(tile_b, _round_up(B, 8))
    B_pad = _round_up(B, tile_b)
    if B_pad != B:
        state = jnp.pad(state, ((0, B_pad - B), (0, 0)))
    n_tiles = B_pad // tile_b

    # --- Kernel 1: batched, parallel MLP trunk -----------------------------
    head = pl.pallas_call(
        _mlp_trunk_kernel,
        out_shape=jax.ShapeDtypeStruct((B_pad, LANE), jnp.float32),
        grid=(n_tiles,),
        in_specs=[
            pl.BlockSpec((tile_b, S), lambda i: (i, 0)),     # state tile
            pl.BlockSpec((S, fc1), lambda i: (0, 0)),        # weights: VMEM-resident
            pl.BlockSpec((1, fc1), lambda i: (0, 0)),
            pl.BlockSpec((fc1, h2), lambda i: (0, 0)),
            pl.BlockSpec((1, h2), lambda i: (0, 0)),
            pl.BlockSpec((h2, LANE), lambda i: (0, 0)),
            pl.BlockSpec((1, LANE), lambda i: (0, 0)),
        ],
        out_specs=pl.BlockSpec((tile_b, LANE), lambda i: (i, 0)),
        compiler_params=pltpu.CompilerParams(
            # batch axis is independent -> shard across TCs on v7x
            dimension_semantics=("parallel",),
            # NOTE: per-tile VMEM use is <1 MiB here; if tile_b is scaled up
            # aggressively, set vmem_limit_bytes and re-derive for v7x (64 MiB).
        ),
    )(state, fused["w1"], fused["b1"], fused["w_branch"], fused["b_branch"],
      fused["w_head"], fused["b_head"])

    # --- Kernel 2: global-mean dueling combine ------------------------------
    # Single step over the whole (small) head tensor; for very large batches
    # this would be split into a sum pass + an add pass.
    q_full = pl.pallas_call(
        functools.partial(_combine_kernel, action_size=A, n_valid=B),
        out_shape=jax.ShapeDtypeStruct((B_pad, LANE), jnp.float32),
        grid=(1,),
        in_specs=[pl.BlockSpec((B_pad, LANE), lambda i: (0, 0))],
        out_specs=pl.BlockSpec((B_pad, LANE), lambda i: (0, 0)),
        compiler_params=pltpu.CompilerParams(
            dimension_semantics=("arbitrary",)),
    )(head)

    # Lane-dense kernel output; narrow slice is free wrapper-side plumbing.
    return q_full[:B, :A]


# ---------------------------------------------------------------------------
# Init (mimics nn.Linear default U(-1/sqrt(fan_in), 1/sqrt(fan_in))) and
# pure-JAX references for correctness checking.
# ---------------------------------------------------------------------------
def init_params(key, state_size, action_size, fc1_units=64, fc2_units=64):
    ks = jax.random.split(key, 10)

    def linear(kw, kb, fan_in, fan_out):
        bound = 1.0 / jnp.sqrt(fan_in)
        w = jax.random.uniform(kw, (fan_in, fan_out), jnp.float32, -bound, bound)
        b = jax.random.uniform(kb, (1, fan_out), jnp.float32, -bound, bound)
        return w, b

    w1, b1 = linear(ks[0], ks[1], state_size, fc1_units)
    wa, ba = linear(ks[2], ks[3], fc1_units, fc2_units)
    wv, bv = linear(ks[4], ks[5], fc1_units, fc2_units)
    wao, bao = linear(ks[6], ks[7], fc2_units, action_size)
    wvo, bvo = linear(ks[8], ks[9], fc2_units, 1)
    return dict(w1=w1, b1=b1, wa=wa, ba=ba, wao=wao, bao=bao,
                wv=wv, bv=bv, wvo=wvo, bvo=bvo)


def reference_forward(state, p, cast=lambda t: t):
    """Pure-JAX reference of the PyTorch forward.

    With cast = bf16 round-trip it mirrors the kernel's precision scheme
    (bf16 matmul operands, f32 accumulation / bias / ReLU).
    """
    x = cast(state)
    feat = jax.nn.relu(jnp.dot(x, cast(p["w1"])) + p["b1"])
    adv_h = jax.nn.relu(jnp.dot(cast(feat), cast(p["wa"])) + p["ba"])
    val_h = jax.nn.relu(jnp.dot(cast(feat), cast(p["wv"])) + p["bv"])
    adv = jnp.dot(cast(adv_h), cast(p["wao"])) + p["bao"]
    val = jnp.dot(cast(val_h), cast(p["wvo"])) + p["bvo"]
    return val + adv + jnp.mean(adv)   # global mean, ADDED — as in the source


if __name__ == "__main__":
    key = jax.random.PRNGKey(0)
    k_params, k_state = jax.random.split(key)

    # Small but batched enough to exercise the tiled / parallel grid (2 tiles,
    # with batch padding 200 -> 256).
    B, state_size, action_size = 200, 16, 4
    params = init_params(k_params, state_size, action_size,
                         fc1_units=64, fc2_units=64)
    state = jax.random.normal(k_state, (B, state_size), jnp.float32)

    fused = fuse_params(params)
    out = dual_qnetwork_forward(state, fused, action_size=action_size)
    out = jax.block_until_ready(out)

    assert out.shape == (B, action_size)

    # Tight check against a reference that mirrors the kernel's bf16-weight /
    # f32-accumulate precision scheme.
    bf16_rt = lambda t: t.astype(jnp.bfloat16).astype(jnp.float32)
    ref_mirror = reference_forward(state, params, cast=bf16_rt)
    assert jnp.allclose(out, ref_mirror, atol=1e-3, rtol=1e-3)

    # Loose sanity check against the full-f32 PyTorch-equivalent forward
    # (difference is only bf16 weight/activation rounding).
    ref_f32 = reference_forward(state, params)
    assert jnp.allclose(out, ref_f32, atol=1e-1, rtol=1e-1)

    print("KERNEL_OK")
</pallas_src>

<mosaic_0001>
module attributes {stable_mosaic.version = 11 : i64} {
  func.func @_combine_kernel(%arg0: i32, %arg1: memref<256x128xf32, #tpu.memory_space<vmem>>, %arg2: memref<256x128xf32, #tpu.memory_space<vmem>>) attributes {dimension_semantics = [#tpu.dimension_semantics<arbitrary>], iteration_bounds = array<i64: 1>, scalar_prefetch = 0 : i64, scratch_operands = 0 : i64, tpu.core_type = #tpu.core_type<tc>, window_params = [{pipeline_mode = #tpu.pipeline_mode<synchronous>, transform_indices = @transform_0, window_bounds = array<i64: 256, 128>}, {pipeline_mode = #tpu.pipeline_mode<synchronous>, transform_indices = @transform_1, window_bounds = array<i64: 256, 128>}]} {
    %c0 = arith.constant 0 : index
    %c0_0 = arith.constant 0 : index
    %0 = vector.load %arg1[%c0, %c0_0] : memref<256x128xf32, #tpu.memory_space<vmem>>, vector<256x128xf32>
    %1 = tpu.iota {dimensions = array<i32: 0>} : vector<256x128xi32>
    %2 = tpu.iota {dimensions = array<i32: 1>} : vector<256x128xi32>
    %c200_i32 = arith.constant 200 : i32
    %3 = vector.broadcast %c200_i32 : i32 to vector<256x128xi32>
    %4 = arith.cmpi slt, %1, %3 : vector<256x128xi32>
    %c4_i32 = arith.constant 4 : i32
    %5 = vector.broadcast %c4_i32 : i32 to vector<256x128xi32>
    %6 = arith.cmpi slt, %2, %5 : vector<256x128xi32>
    %7 = arith.andi %4, %6 : vector<256x128xi1>
    %cst = arith.constant 0.000000e+00 : f32
    %8 = vector.broadcast %cst : f32 to vector<256x128xf32>
    %9 = arith.select %7, %0, %8 : vector<256x128xi1>, vector<256x128xf32>
    %10 = vector.shape_cast %9 : vector<256x128xf32> to vector<1x256x128xf32>
    %cst_1 = arith.constant dense<0.000000e+00> : vector<1xf32>
    %11 = vector.multi_reduction <add>, %10, %cst_1 [1, 2] : vector<1x256x128xf32> to vector<1xf32>
    %12 = vector.shape_cast %11 : vector<1xf32> to vector<1x1x1xf32>
    %13 = vector.extract %12[0, 0, 0] : f32 from vector<1x1x1xf32>
    %cst_2 = arith.constant 1.250000e-03 : f32
    %14 = arith.mulf %13, %cst_2 : f32
    %15 = vector.extract_strided_slice %0 {offsets = [0, 4], sizes = [256, 1], strides = [1, 1]} : vector<256x128xf32> to vector<256x1xf32>
    %16 = vector.broadcast %15 : vector<256x1xf32> to vector<256x128xf32>
    %17 = arith.addf %0, %16 : vector<256x128xf32>
    %18 = vector.broadcast %14 : f32 to vector<256x128xf32>
    %19 = arith.addf %17, %18 : vector<256x128xf32>
    %c0_3 = arith.constant 0 : index
    %c0_4 = arith.constant 0 : index
    %20 = vector.load %arg2[%c0_3, %c0_4] : memref<256x128xf32, #tpu.memory_space<vmem>>, vector<256x128xf32>
    tpu.vector_store %arg2[%c0_3, %c0_4], %19 {strides = array<i32>} : memref<256x128xf32, #tpu.memory_space<vmem>>, vector<256x128xf32>,
    return
  }
  func.func @transform_0(%arg0: i32) -> (i32, i32) {
    %c0_i32 = arith.constant 0 : i32
    %c0_i32_0 = arith.constant 0 : i32
    %c0_i32_1 = arith.constant 0 : i32
    return %c0_i32, %c0_i32_0 : i32, i32
  }
  func.func @transform_1(%arg0: i32) -> (i32, i32) {
    %c0_i32 = arith.constant 0 : i32
    %c0_i32_0 = arith.constant 0 : i32
    %c0_i32_1 = arith.constant 0 : i32
    return %c0_i32, %c0_i32_0 : i32, i32
  }
}

module attributes {stable_mosaic.version = 11 : i64} {
  func.func @_mlp_trunk_kernel(%arg0: i32, %arg1: memref<128x16xf32, #tpu.memory_space<vmem>>, %arg2: memref<16x64xbf16, #tpu.memory_space<vmem>>, %arg3: memref<1x64xf32, #tpu.memory_space<vmem>>, %arg4: memref<64x128xbf16, #tpu.memory_space<vmem>>, %arg5: memref<1x128xf32, #tpu.memory_space<vmem>>, %arg6: memref<128x128xbf16, #tpu.memory_space<vmem>>, %arg7: memref<1x128xf32, #tpu.memory_space<vmem>>, %arg8: memref<128x128xf32, #tpu.memory_space<vmem>>) attributes {dimension_semantics = [#tpu.dimension_semantics<parallel>], iteration_bounds = array<i64: 2>, scalar_prefetch = 0 : i64, scratch_operands = 0 : i64, tpu.core_type = #tpu.core_type<tc>, window_params = [{transform_indices = @transform_0, window_bounds = array<i64: 128, 16>}, {pipeline_mode = #tpu.pipeline_mode<synchronous>, transform_indices = @transform_1, window_bounds = array<i64: 16, 64>}, {pipeline_mode = #tpu.pipeline_mode<synchronous>, transform_indices = @transform_2, window_bounds = array<i64: 1, 64>}, {pipeline_mode = #tpu.pipeline_mode<synchronous>, transform_indices = @transform_3, window_bounds = array<i64: 64, 128>}, {pipeline_mode = #tpu.pipeline_mode<synchronous>, transform_indices = @transform_4, window_bounds = array<i64: 1, 128>}, {pipeline_mode = #tpu.pipeline_mode<synchronous>, transform_indices = @transform_5, window_bounds = array<i64: 128, 128>}, {pipeline_mode = #tpu.pipeline_mode<synchronous>, transform_indices = @transform_6, window_bounds = array<i64: 1, 128>}, {transform_indices = @transform_7, window_bounds = array<i64: 128, 128>}]} {
    %c0 = arith.constant 0 : index
    %c0_0 = arith.constant 0 : index
    %0 = vector.load %arg1[%c0, %c0_0] : memref<128x16xf32, #tpu.memory_space<vmem>>, vector<128x16xf32>
    %1 = arith.truncf %0 : vector<128x16xf32> to vector<128x16xbf16>
    %c0_1 = arith.constant 0 : index
    %c0_2 = arith.constant 0 : index
    %2 = vector.load %arg2[%c0_1, %c0_2] : memref<16x64xbf16, #tpu.memory_space<vmem>>, vector<16x64xbf16>
    %cst = arith.constant dense<0.000000e+00> : vector<128x64xf32>
    %3 = tpu.matmul %1, %2, %cst {dimension_numbers = #tpu.dot_dimension_numbers<[1], [0], [0], [1], [0, 0, 1, 1], [], []>} : vector<128x16xbf16>, vector<16x64xbf16>, vector<128x64xf32> -> vector<128x64xf32>
    %c0_3 = arith.constant 0 : index
    %c0_4 = arith.constant 0 : index
    %4 = vector.load %arg3[%c0_3, %c0_4] : memref<1x64xf32, #tpu.memory_space<vmem>>, vector<1x64xf32>
    %5 = vector.broadcast %4 : vector<1x64xf32> to vector<128x64xf32>
    %6 = arith.addf %3, %5 : vector<128x64xf32>
    %cst_5 = arith.constant 0.000000e+00 : f32
    %7 = vector.broadcast %cst_5 : f32 to vector<128x64xf32>
    %8 = arith.maximumf %6, %7 : vector<128x64xf32>
    %9 = arith.truncf %8 : vector<128x64xf32> to vector<128x64xbf16>
    %c0_6 = arith.constant 0 : index
    %c0_7 = arith.constant 0 : index
    %10 = vector.load %arg4[%c0_6, %c0_7] : memref<64x128xbf16, #tpu.memory_space<vmem>>, vector<64x128xbf16>
    %cst_8 = arith.constant dense<0.000000e+00> : vector<128x128xf32>
    %11 = tpu.matmul %9, %10, %cst_8 {dimension_numbers = #tpu.dot_dimension_numbers<[1], [0], [0], [1], [0, 0, 1, 1], [], []>} : vector<128x64xbf16>, vector<64x128xbf16>, vector<128x128xf32> -> vector<128x128xf32>
    %c0_9 = arith.constant 0 : index
    %c0_10 = arith.constant 0 : index
    %12 = vector.load %arg5[%c0_9, %c0_10] : memref<1x128xf32, #tpu.memory_space<vmem>>, vector<1x128xf32>
    %13 = vector.broadcast %12 : vector<1x128xf32> to vector<128x128xf32>
    %14 = arith.addf %11, %13 : vector<128x128xf32>
    %cst_11 = arith.constant 0.000000e+00 : f32
    %15 = vector.broadcast %cst_11 : f32 to vector<128x128xf32>
    %16 = arith.maximumf %14, %15 : vector<128x128xf32>
    %17 = arith.truncf %16 : vector<128x128xf32> to vector<128x128xbf16>
    %c0_12 = arith.constant 0 : index
    %c0_13 = arith.constant 0 : index
    %18 = vector.load %arg6[%c0_12, %c0_13] : memref<128x128xbf16, #tpu.memory_space<vmem>>, vector<128x128xbf16>
    %cst_14 = arith.constant dense<0.000000e+00> : vector<128x128xf32>
    %19 = tpu.matmul %17, %18, %cst_14 {dimension_numbers = #tpu.dot_dimension_numbers<[1], [0], [0], [1], [0, 0, 1, 1], [], []>} : vector<128x128xbf16>, vector<128x128xbf16>, vector<128x128xf32> -> vector<128x128xf32>
    %c0_15 = arith.constant 0 : index
    %c0_16 = arith.constant 0 : index
    %20 = vector.load %arg7[%c0_15, %c0_16] : memref<1x128xf32, #tpu.memory_space<vmem>>, vector<1x128xf32>
    %21 = vector.broadcast %20 : vector<1x128xf32> to vector<128x128xf32>
    %22 = arith.addf %19, %21 : vector<128x128xf32>
    %c0_17 = arith.constant 0 : index
    %c0_18 = arith.constant 0 : index
    %23 = vector.load %arg8[%c0_17, %c0_18] : memref<128x128xf32, #tpu.memory_space<vmem>>, vector<128x128xf32>
    tpu.vector_store %arg8[%c0_17, %c0_18], %22 {strides = array<i32>} : memref<128x128xf32, #tpu.memory_space<vmem>>, vector<128x128xf32>,
    return
  }
  func.func @transform_0(%arg0: i32) -> (i32, i32) {
    %c0_i32 = arith.constant 0 : i32
    %c0_i32_0 = arith.constant 0 : i32
    return %arg0, %c0_i32 : i32, i32
  }
  func.func @transform_1(%arg0: i32) -> (i32, i32) {
    %c0_i32 = arith.constant 0 : i32
    %c0_i32_0 = arith.constant 0 : i32
    %c0_i32_1 = arith.constant 0 : i32
    return %c0_i32, %c0_i32_0 : i32, i32
  }
  func.func @transform_2(%arg0: i32) -> (i32, i32) {
    %c0_i32 = arith.constant 0 : i32
    %c0_i32_0 = arith.constant 0 : i32
    %c0_i32_1 = arith.constant 0 : i32
    return %c0_i32, %c0_i32_0 : i32, i32
  }
  func.func @transform_3(%arg0: i32) -> (i32, i32) {
    %c0_i32 = arith.constant 0 : i32
    %c0_i32_0 = arith.constant 0 : i32
    %c0_i32_1 = arith.constant 0 : i32
    return %c0_i32, %c0_i32_0 : i32, i32
  }
  func.func @transform_4(%arg0: i32) -> (i32, i32) {
    %c0_i32 = arith.constant 0 : i32
    %c0_i32_0 = arith.constant 0 : i32
    %c0_i32_1 = arith.constant 0 : i32
    return %c0_i32, %c0_i32_0 : i32, i32
  }
  func.func @transform_5(%arg0: i32) -> (i32, i32) {
    %c0_i32 = arith.constant 0 : i32
    %c0_i32_0 = arith.constant 0 : i32
    %c0_i32_1 = arith.constant 0 : i32
    return %c0_i32, %c0_i32_0 : i32, i32
  }
  func.func @transform_6(%arg0: i32) -> (i32, i32) {
    %c0_i32 = arith.constant 0 : i32
    %c0_i32_0 = arith.constant 0 : i32
    %c0_i32_1 = arith.constant 0 : i32
    return %c0_i32, %c0_i32_0 : i32, i32
  }
  func.func @transform_7(%arg0: i32) -> (i32, i32) {
    %c0_i32 = arith.constant 0 : i32
    %c0_i32_0 = arith.constant 0 : i32
    return %arg0, %c0_i32 : i32, i32
  }
}

</mosaic_0001>

<llo_original>
// kernel: dual_qnetwork_forward.3
$region0: #{dual_qnetwork_forward.3}
  #allocation0 [shape = 'u32[]', space=smem, size = 0x4, offset = 0x4, fixed_abs, tag = 'smem constant byte address 0x4 - core index']
  #allocation1 [shape = 'u32[144,128]{1,0:T(1,128)}', space=vmem, size = 0x12000, scoped, tag = 'internal scratch']
  %s0 = inlined_call_operand.vmem [shape: f32[256,128], index: 0, kind: input, shape index: {}]
  %s1 = inlined_call_operand.vmem [shape: f32[256,128], index: 1, kind: output, shape index: {}]
  %s2 = sld [smem:[#allocation0]]
  $region14: #{dual_qnetwork_forward.3} parent=0
    _
  %s4 = ssub.s32 1, %s2
  %s5 = scalar_select 0, %s4, %s2
  // Predicated region
  $region2: #{dual_qnetwork_forward.3} parent=0 // pred_check
    _
  $region3: #{dual_qnetwork_forward.3} parent=0 // pred_check_branch
    %7 = sbr.rel (0) target = $region5
  $region4: #{dual_qnetwork_forward.3} parent=0 // pred_region
    _
  $region5: #{dual_qnetwork_forward.3} parent=0 // pred_fallthru
    _
  %v8 = vld [vmem:[%s0] sm:$0xff]
  %v9 = vld [vmem:[%s0 + $0x8] sm:$0xff]
  %v10 = vld [vmem:[%s0 + $0x10] sm:$0xff]
  %v11 = vld [vmem:[%s0 + $0x18] sm:$0xff]
  %v12 = vld [vmem:[%s0 + $0x20] sm:$0xff]
  %v13 = vld [vmem:[%s0 + $0x28] sm:$0xff]
  %v14 = vld [vmem:[%s0 + $0x30] sm:$0xff]
  %v15 = vld [vmem:[%s0 + $0x38] sm:$0xff]
  %v16 = vld [vmem:[%s0 + $0x40] sm:$0xff]
  %v17 = vld [vmem:[%s0 + $0x48] sm:$0xff]
  %v18 = vld [vmem:[%s0 + $0x50] sm:$0xff]
  %v19 = vld [vmem:[%s0 + $0x58] sm:$0xff]
  %v20 = vld [vmem:[%s0 + $0x60] sm:$0xff]
  %v21 = vld [vmem:[%s0 + $0x68] sm:$0xff]
  %v22 = vld [vmem:[%s0 + $0x70] sm:$0xff]
  %v23 = vld [vmem:[%s0 + $0x78] sm:$0xff]
  %v24 = vld [vmem:[%s0 + $0x80] sm:$0xff]
  %v25 = vld [vmem:[%s0 + $0x88] sm:$0xff]
  %v26 = vld [vmem:[%s0 + $0x90] sm:$0xff]
  %v27 = vld [vmem:[%s0 + $0x98] sm:$0xff]
  %v28 = vld [vmem:[%s0 + $0xa0] sm:$0xff]
  %v29 = vld [vmem:[%s0 + $0xa8] sm:$0xff]
  %v30 = vld [vmem:[%s0 + $0xb0] sm:$0xff]
  %v31 = vld [vmem:[%s0 + $0xb8] sm:$0xff]
  %v32 = vld [vmem:[%s0 + $0xc0] sm:$0xff]
  %v33 = vld [vmem:[%s0 + $0xc8] sm:$0xff]
  %v34 = vld [vmem:[%s0 + $0xd0] sm:$0xff]
  %v35 = vld [vmem:[%s0 + $0xd8] sm:$0xff]
  %v36 = vld [vmem:[%s0 + $0xe0] sm:$0xff]
  %v37 = vld [vmem:[%s0 + $0xe8] sm:$0xff]
  %v38 = vld [vmem:[%s0 + $0xf0] sm:$0xff]
  %v39 = vld [vmem:[%s0 + $0xf8] sm:$0xff]
  %v40 = vlaneseq
  %v41 = vshrl.u32 %v40, 7
  %v42 = vadd.s32 %v41, 8
  %v43 = vadd.s32 %v41, 16
  %v44 = vadd.s32 %v41, 24
  %v45 = vadd.s32 %v41, 32
  %v46 = vadd.s32 %v41, 40
  %v47 = vadd.s32 %v41, 48
  %v48 = vadd.s32 %v41, 56
  %v49 = vadd.s32 %v41, 64
  %v50 = vadd.s32 %v41, 72
  %v51 = vadd.s32 %v41, 80
  %v52 = vadd.s32 %v41, 88
  %v53 = vadd.s32 %v41, 96
  %v54 = vadd.s32 %v41, 104
  %v55 = vadd.s32 %v41, 112
  %v56 = vadd.s32 %v41, 120
  %v57 = vadd.s32 %v41, 128
  %v58 = vadd.s32 %v41, 136
  %v59 = vadd.s32 %v41, 144
  %v60 = vadd.s32 %v41, 152
  %v61 = vadd.s32 %v41, 160
  %v62 = vadd.s32 %v41, 168
  %v63 = vadd.s32 %v41, 176
  %v64 = vadd.s32 %v41, 184
  %v65 = vadd.s32 %v41, 192
  %v66 = vadd.s32 %v41, 200
  %v67 = vadd.s32 %v41, 208
  %v68 = vadd.s32 %v41, 216
  %v69 = vadd.s32 %v41, 224
  %v70 = vadd.s32 %v41, 232
  %v71 = vadd.s32 %v41, 240
  %v72 = vadd.s32 %v41, 248
  %v73 = vlaneseq
  %v74 = vand.u32 %v73, 127
  %vm75 = vcmp.lt.s32.totalorder %v41, 200
  %vm76 = vcmp.lt.s32.totalorder %v42, 200
  %vm77 = vcmp.lt.s32.totalorder %v43, 200
  %vm78 = vcmp.lt.s32.totalorder %v44, 200
  %vm79 = vcmp.lt.s32.totalorder %v45, 200
  %vm80 = vcmp.lt.s32.totalorder %v46, 200
  %vm81 = vcmp.lt.s32.totalorder %v47, 200
  %vm82 = vcmp.lt.s32.totalorder %v48, 200
  %vm83 = vcmp.lt.s32.totalorder %v49, 200
  %vm84 = vcmp.lt.s32.totalorder %v50, 200
  %vm85 = vcmp.lt.s32.totalorder %v51, 200
  %vm86 = vcmp.lt.s32.totalorder %v52, 200
  %vm87 = vcmp.lt.s32.totalorder %v53, 200
  %vm88 = vcmp.lt.s32.totalorder %v54, 200
  %vm89 = vcmp.lt.s32.totalorder %v55, 200
  %vm90 = vcmp.lt.s32.totalorder %v56, 200
  %vm91 = vcmp.lt.s32.totalorder %v57, 200
  %vm92 = vcmp.lt.s32.totalorder %v58, 200
  %vm93 = vcmp.lt.s32.totalorder %v59, 200
  %vm94 = vcmp.lt.s32.totalorder %v60, 200
  %vm95 = vcmp.lt.s32.totalorder %v61, 200
  %vm96 = vcmp.lt.s32.totalorder %v62, 200
  %vm97 = vcmp.lt.s32.totalorder %v63, 200
  %vm98 = vcmp.lt.s32.totalorder %v64, 200
  %vm99 = vcmp.lt.s32.totalorder %v65, 200
  %vm100 = vcmp.lt.s32.totalorder %v66, 200
  %vm101 = vcmp.lt.s32.totalorder %v67, 200
  %vm102 = vcmp.lt.s32.totalorder %v68, 200
  %vm103 = vcmp.lt.s32.totalorder %v69, 200
  %vm104 = vcmp.lt.s32.totalorder %v70, 200
  %vm105 = vcmp.lt.s32.totalorder %v71, 200
  %vm106 = vcmp.lt.s32.totalorder %v72, 200
  %vm107 = vcmp.lt.s32.totalorder %v74, 4
  %vm108 = vmand %vm75, %vm107
  %vm109 = vmand %vm76, %vm107
  %vm110 = vmand %vm77, %vm107
  %vm111 = vmand %vm78, %vm107
  %vm112 = vmand %vm79, %vm107
  %vm113 = vmand %vm80, %vm107
  %vm114 = vmand %vm81, %vm107
  %vm115 = vmand %vm82, %vm107
  %vm116 = vmand %vm83, %vm107
  %vm117 = vmand %vm84, %vm107
  %vm118 = vmand %vm85, %vm107
  %vm119 = vmand %vm86, %vm107
  %vm120 = vmand %vm87, %vm107
  %vm121 = vmand %vm88, %vm107
  %vm122 = vmand %vm89, %vm107
  %vm123 = vmand %vm90, %vm107
  %vm124 = vmand %vm91, %vm107
  %vm125 = vmand %vm92, %vm107
  %vm126 = vmand %vm93, %vm107
  %vm127 = vmand %vm94, %vm107
  %vm128 = vmand %vm95, %vm107
  %vm129 = vmand %vm96, %vm107
  %vm130 = vmand %vm97, %vm107
  %vm131 = vmand %vm98, %vm107
  %vm132 = vmand %vm99, %vm107
  %vm133 = vmand %vm100, %vm107
  %vm134 = vmand %vm101, %vm107
  %vm135 = vmand %vm102, %vm107
  %vm136 = vmand %vm103, %vm107
  %vm137 = vmand %vm104, %vm107
  %vm138 = vmand %vm105, %vm107
  %vm139 = vmand %vm106, %vm107
  %v140 = vsel %vm108, %v8, 0.0
  %v141 = vsel %vm109, %v9, 0.0
  %v142 = vsel %vm110, %v10, 0.0
  %v143 = vsel %vm111, %v11, 0.0
  %v144 = vsel %vm112, %v12, 0.0
  %v145 = vsel %vm113, %v13, 0.0
  %v146 = vsel %vm114, %v14, 0.0
  %v147 = vsel %vm115, %v15, 0.0
  %v148 = vsel %vm116, %v16, 0.0
  %v149 = vsel %vm117, %v17, 0.0
  %v150 = vsel %vm118, %v18, 0.0
  %v151 = vsel %vm119, %v19, 0.0
  %v152 = vsel %vm120, %v20, 0.0
  %v153 = vsel %vm121, %v21, 0.0
  %v154 = vsel %vm122, %v22, 0.0
  %v155 = vsel %vm123, %v23, 0.0
  %v156 = vsel %vm124, %v24, 0.0
  %v157 = vsel %vm125, %v25, 0.0
  %v158 = vsel %vm126, %v26, 0.0
  %v159 = vsel %vm127, %v27, 0.0
  %v160 = vsel %vm128, %v28, 0.0
  %v161 = vsel %vm129, %v29, 0.0
  %v162 = vsel %vm130, %v30, 0.0
  %v163 = vsel %vm131, %v31, 0.0
  %v164 = vsel %vm132, %v32, 0.0
  %v165 = vsel %vm133, %v33, 0.0
  %v166 = vsel %vm134, %v34, 0.0
  %v167 = vsel %vm135, %v35, 0.0
  %v168 = vsel %vm136, %v36, 0.0
  %v169 = vsel %vm137, %v37, 0.0
  %v170 = vsel %vm138, %v38, 0.0
  %v171 = vsel %vm139, %v39, 0.0
  %v172 = vadd.f32 %v140, %v141
  %v173 = vadd.f32 %v172, %v142
  %v174 = vadd.f32 %v173, %v143
  %v175 = vadd.f32 %v174, %v144
  %v176 = vadd.f32 %v175, %v145
  %v177 = vadd.f32 %v176, %v146
  %v178 = vadd.f32 %v177, %v147
  %v179 = vadd.f32 %v178, %v148
  %v180 = vadd.f32 %v179, %v149
  %v181 = vadd.f32 %v180, %v150
  %v182 = vadd.f32 %v181, %v151
  %v183 = vadd.f32 %v182, %v152
  %v184 = vadd.f32 %v183, %v153
  %v185 = vadd.f32 %v184, %v154
  %v186 = vadd.f32 %v185, %v155
  %v187 = vadd.f32 %v186, %v156
  %v188 = vadd.f32 %v187, %v157
  %v189 = vadd.f32 %v188, %v158
  %v190 = vadd.f32 %v189, %v159
  %v191 = vadd.f32 %v190, %v160
  %v192 = vadd.f32 %v191, %v161
  %v193 = vadd.f32 %v192, %v162
  %v194 = vadd.f32 %v193, %v163
  %v195 = vadd.f32 %v194, %v164
  %v196 = vadd.f32 %v195, %v165
  %v197 = vadd.f32 %v196, %v166
  %v198 = vadd.f32 %v197, %v167
  %v199 = vadd.f32 %v198, %v168
  %v200 = vadd.f32 %v199, %v169
  %v201 = vadd.f32 %v200, %v170
  %v202 = vadd.f32 %v201, %v171
  %203 = vadd.xlane.f32.xlu0 %v202
  %v204 = vpop.xlane.xlu0 %203
  %v205 = vrot.slane %v204, 4
  %v206 = vadd.f32 %v204, %v205
  %v207 = vrot.slane %v206, 2
  %v208 = vadd.f32 %v206, %v207
  %v209 = vrot.slane %v208, 1
  %v210 = vadd.f32 %v208, %v209
  %s211 = vtos %v210
  %s212 = smul.f32 %s211, 0.00125
  %214 = vset.pattern.permute.xlu0 4
  %215 = vperm.xlu0 %214, %v8
  %v216 = vpop.permute.xlu0 %215
  %219 = vset.pattern.permute.xlu0 4
  %220 = vperm.xlu0 %219, %v9
  %v221 = vpop.permute.xlu0 %220
  %224 = vset.pattern.permute.xlu0 4
  %225 = vperm.xlu0 %224, %v10
  %v226 = vpop.permute.xlu0 %225
  %229 = vset.pattern.permute.xlu0 4
  %230 = vperm.xlu0 %229, %v11
  %v231 = vpop.permute.xlu0 %230
  %234 = vset.pattern.permute.xlu0 4
  %235 = vperm.xlu0 %234, %v12
  %v236 = vpop.permute.xlu0 %235
  %239 = vset.pattern.permute.xlu0 4
  %240 = vperm.xlu0 %239, %v13
  %v241 = vpop.permute.xlu0 %240
  %244 = vset.pattern.permute.xlu0 4
  %245 = vperm.xlu0 %244, %v14
  %v246 = vpop.permute.xlu0 %245
  %249 = vset.pattern.permute.xlu0 4
  %250 = vperm.xlu0 %249, %v15
  %v251 = vpop.permute.xlu0 %250
  %254 = vset.pattern.permute.xlu0 4
  %255 = vperm.xlu0 %254, %v16
  %v256 = vpop.permute.xlu0 %255
  %259 = vset.pattern.permute.xlu0 4
  %260 = vperm.xlu0 %259, %v17
  %v261 = vpop.permute.xlu0 %260
  %264 = vset.pattern.permute.xlu0 4
  %265 = vperm.xlu0 %264, %v18
  %v266 = vpop.permute.xlu0 %265
  %269 = vset.pattern.permute.xlu0 4
  %270 = vperm.xlu0 %269, %v19
  %v271 = vpop.permute.xlu0 %270
  %274 = vset.pattern.permute.xlu0 4
  %275 = vperm.xlu0 %274, %v20
  %v276 = vpop.permute.xlu0 %275
  %279 = vset.pattern.permute.xlu0 4
  %280 = vperm.xlu0 %279, %v21
  %v281 = vpop.permute.xlu0 %280
  %284 = vset.pattern.permute.xlu0 4
  %285 = vperm.xlu0 %284, %v22
  %v286 = vpop.permute.xlu0 %285
  %289 = vset.pattern.permute.xlu0 4
  %290 = vperm.xlu0 %289, %v23
  %v291 = vpop.permute.xlu0 %290
  %294 = vset.pattern.permute.xlu0 4
  %295 = vperm.xlu0 %294, %v24
  %v296 = vpop.permute.xlu0 %295
  %299 = vset.pattern.permute.xlu0 4
  %300 = vperm.xlu0 %299, %v25
  %v301 = vpop.permute.xlu0 %300
  %304 = vset.pattern.permute.xlu0 4
  %305 = vperm.xlu0 %304, %v26
  %v306 = vpop.permute.xlu0 %305
  %309 = vset.pattern.permute.xlu0 4
  %310 = vperm.xlu0 %309, %v27
  %v311 = vpop.permute.xlu0 %310
  %314 = vset.pattern.permute.xlu0 4
  %315 = vperm.xlu0 %314, %v28
  %v316 = vpop.permute.xlu0 %315
  %319 = vset.pattern.permute.xlu0 4
  %320 = vperm.xlu0 %319, %v29
  %v321 = vpop.permute.xlu0 %320
  %324 = vset.pattern.permute.xlu0 4
  %325 = vperm.xlu0 %324, %v30
  %v326 = vpop.permute.xlu0 %325
  %329 = vset.pattern.permute.xlu0 4
  %330 = vperm.xlu0 %329, %v31
  %v331 = vpop.permute.xlu0 %330
  %334 = vset.pattern.permute.xlu0 4
  %335 = vperm.xlu0 %334, %v32
  %v336 = vpop.permute.xlu0 %335
  %339 = vset.pattern.permute.xlu0 4
  %340 = vperm.xlu0 %339, %v33
  %v341 = vpop.permute.xlu0 %340
  %344 = vset.pattern.permute.xlu0 4
  %345 = vperm.xlu0 %344, %v34
  %v346 = vpop.permute.xlu0 %345
  %349 = vset.pattern.permute.xlu0 4
  %350 = vperm.xlu0 %349, %v35
  %v351 = vpop.permute.xlu0 %350
  %354 = vset.pattern.permute.xlu0 4
  %355 = vperm.xlu0 %354, %v36
  %v356 = vpop.permute.xlu0 %355
  %359 = vset.pattern.permute.xlu0 4
  %360 = vperm.xlu0 %359, %v37
  %v361 = vpop.permute.xlu0 %360
  %364 = vset.pattern.permute.xlu0 4
  %365 = vperm.xlu0 %364, %v38
  %v366 = vpop.permute.xlu0 %365
  %369 = vset.pattern.permute.xlu0 4
  %370 = vperm.xlu0 %369, %v39
  %v371 = vpop.permute.xlu0 %370
  %v373 = vadd.f32 %v8, %v216
  %v374 = vadd.f32 %v9, %v221
  %v375 = vadd.f32 %v10, %v226
  %v376 = vadd.f32 %v11, %v231
  %v377 = vadd.f32 %v12, %v236
  %v378 = vadd.f32 %v13, %v241
  %v379 = vadd.f32 %v14, %v246
  %v380 = vadd.f32 %v15, %v251
  %v381 = vadd.f32 %v16, %v256
  %v382 = vadd.f32 %v17, %v261
  %v383 = vadd.f32 %v18, %v266
  %v384 = vadd.f32 %v19, %v271
  %v385 = vadd.f32 %v20, %v276
  %v386 = vadd.f32 %v21, %v281
  %v387 = vadd.f32 %v22, %v286
  %v388 = vadd.f32 %v23, %v291
  %v389 = vadd.f32 %v24, %v296
  %v390 = vadd.f32 %v25, %v301
  %v391 = vadd.f32 %v26, %v306
  %v392 = vadd.f32 %v27, %v311
  %v393 = vadd.f32 %v28, %v316
  %v394 = vadd.f32 %v29, %v321
  %v395 = vadd.f32 %v30, %v326
  %v396 = vadd.f32 %v31, %v331
  %v397 = vadd.f32 %v32, %v336
  %v398 = vadd.f32 %v33, %v341
  %v399 = vadd.f32 %v34, %v346
  %v400 = vadd.f32 %v35, %v351
  %v401 = vadd.f32 %v36, %v356
  %v402 = vadd.f32 %v37, %v361
  %v403 = vadd.f32 %v38, %v366
  %v404 = vadd.f32 %v39, %v371
  %v405 = vstv %s212
  %v406 = vadd.f32 %v373, %v405
  %v407 = vadd.f32 %v374, %v405
  %v408 = vadd.f32 %v375, %v405
  %v409 = vadd.f32 %v376, %v405
  %v410 = vadd.f32 %v377, %v405
  %v411 = vadd.f32 %v378, %v405
  %v412 = vadd.f32 %v379, %v405
  %v413 = vadd.f32 %v380, %v405
  %v414 = vadd.f32 %v381, %v405
  %v415 = vadd.f32 %v382, %v405
  %v416 = vadd.f32 %v383, %v405
  %v417 = vadd.f32 %v384, %v405
  %v418 = vadd.f32 %v385, %v405
  %v419 = vadd.f32 %v386, %v405
  %v420 = vadd.f32 %v387, %v405
  %v421 = vadd.f32 %v388, %v405
  %v422 = vadd.f32 %v389, %v405
  %v423 = vadd.f32 %v390, %v405
  %v424 = vadd.f32 %v391, %v405
  %v425 = vadd.f32 %v392, %v405
  %v426 = vadd.f32 %v393, %v405
  %v427 = vadd.f32 %v394, %v405
  %v428 = vadd.f32 %v395, %v405
  %v429 = vadd.f32 %v396, %v405
  %v430 = vadd.f32 %v397, %v405
  %v431 = vadd.f32 %v398, %v405
  %v432 = vadd.f32 %v399, %v405
  %v433 = vadd.f32 %v400, %v405
  %v434 = vadd.f32 %v401, %v405
  %v435 = vadd.f32 %v402, %v405
  %v436 = vadd.f32 %v403, %v405
  %v437 = vadd.f32 %v404, %v405
  %438 = vst [vmem:[%s1] sm:$0xff] %v406
  %439 = vst [vmem:[%s1 + $0x8] sm:$0xff] %v407
  %440 = vst [vmem:[%s1 + $0x10] sm:$0xff] %v408
  %441 = vst [vmem:[%s1 + $0x18] sm:$0xff] %v409
  %442 = vst [vmem:[%s1 + $0x20] sm:$0xff] %v410
  %443 = vst [vmem:[%s1 + $0x28] sm:$0xff] %v411
  %444 = vst [vmem:[%s1 + $0x30] sm:$0xff] %v412
  %445 = vst [vmem:[%s1 + $0x38] sm:$0xff] %v413
  %446 = vst [vmem:[%s1 + $0x40] sm:$0xff] %v414
  %447 = vst [vmem:[%s1 + $0x48] sm:$0xff] %v415
  %448 = vst [vmem:[%s1 + $0x50] sm:$0xff] %v416
  %449 = vst [vmem:[%s1 + $0x58] sm:$0xff] %v417
  %450 = vst [vmem:[%s1 + $0x60] sm:$0xff] %v418
  %451 = vst [vmem:[%s1 + $0x68] sm:$0xff] %v419
  %452 = vst [vmem:[%s1 + $0x70] sm:$0xff] %v420
  %453 = vst [vmem:[%s1 + $0x78] sm:$0xff] %v421
  %454 = vst [vmem:[%s1 + $0x80] sm:$0xff] %v422
  %455 = vst [vmem:[%s1 + $0x88] sm:$0xff] %v423
  %456 = vst [vmem:[%s1 + $0x90] sm:$0xff] %v424
  %457 = vst [vmem:[%s1 + $0x98] sm:$0xff] %v425
  %458 = vst [vmem:[%s1 + $0xa0] sm:$0xff] %v426
  %459 = vst [vmem:[%s1 + $0xa8] sm:$0xff] %v427
  %460 = vst [vmem:[%s1 + $0xb0] sm:$0xff] %v428
  %461 = vst [vmem:[%s1 + $0xb8] sm:$0xff] %v429
  %462 = vst [vmem:[%s1 + $0xc0] sm:$0xff] %v430
  %463 = vst [vmem:[%s1 + $0xc8] sm:$0xff] %v431
  %464 = vst [vmem:[%s1 + $0xd0] sm:$0xff] %v432
  %465 = vst [vmem:[%s1 + $0xd8] sm:$0xff] %v433
  %466 = vst [vmem:[%s1 + $0xe0] sm:$0xff] %v434
  %467 = vst [vmem:[%s1 + $0xe8] sm:$0xff] %v435
  %468 = vst [vmem:[%s1 + $0xf0] sm:$0xff] %v436
  %469 = vst [vmem:[%s1 + $0xf8] sm:$0xff] %v437
  // Predicated region
  $region6: #{dual_qnetwork_forward.3} parent=0 // pred_check
    _
  $region7: #{dual_qnetwork_forward.3} parent=0 // pred_check_branch
    %471 = sbr.rel (0) target = $region9
  $region8: #{dual_qnetwork_forward.3} parent=0 // pred_region
    _
  $region9: #{dual_qnetwork_forward.3} parent=0 // pred_fallthru
    _
  // Predicated region
  $region10: #{dual_qnetwork_forward.3} parent=0 // pred_check
    _
  $region11: #{dual_qnetwork_forward.3} parent=0 // pred_check_branch
    %473 = sbr.rel (0) target = $region13
  $region12: #{dual_qnetwork_forward.3} parent=0 // pred_region
    _
  $region13: #{dual_qnetwork_forward.3} parent=0 // pred_fallthru
    _

// kernel: dual_qnetwork_forward.2
$region0: #{dual_qnetwork_forward.2}
  #allocation0 [shape = 'u32[]', space=smem, size = 0x4, offset = 0x4, fixed_abs, tag = 'smem constant byte address 0x4 - core index']
  #allocation1 [shape = 'u32[144,128]{1,0:T(1,128)}', space=vmem, size = 0x12000, scoped, tag = 'internal scratch']
  %s0 = inlined_call_operand.vmem [shape: f32[256,16], index: 0, kind: input, shape index: {}]
  %s1 = inlined_call_operand.vmem [shape: bf16[16,64], index: 1, kind: input, shape index: {}]
  %s2 = inlined_call_operand.vmem [shape: f32[1,64], index: 2, kind: input, shape index: {}]
  %s3 = inlined_call_operand.vmem [shape: bf16[64,128], index: 3, kind: input, shape index: {}]
  %s4 = inlined_call_operand.vmem [shape: f32[1,128], index: 4, kind: input, shape index: {}]
  %s5 = inlined_call_operand.vmem [shape: bf16[128,128], index: 5, kind: input, shape index: {}]
  %s6 = inlined_call_operand.vmem [shape: f32[1,128], index: 6, kind: input, shape index: {}]
  %s7 = inlined_call_operand.vmem [shape: f32[256,128], index: 7, kind: output, shape index: {}]
  %s8 = sld [smem:[#allocation0]]
  $region61: #{dual_qnetwork_forward.2} parent=0
    _
  %s10 = ssub.s32 1, %s8
  %s11 = scalar_select 0, %s10, %s8
  loop: start=0, step=1, limit=4
  $region2: #{dual_qnetwork_forward.2} parent=0 // loop_pre_header
    _
  $region3: #{dual_qnetwork_forward.2} parent=0 // loop_header
    %s13 = sphi 0, %s17
    %p14 = scmp.ge.s32.totalorder %s13, 4
    %s23 = sphi 0, %s25
    %s26 = sphi 0, %s23
    %s27 = sphi 0, %s26
    %s43 = sphi 0, %s27
    %s47 = sphi 0, %s47
    %s49 = sphi 0, %s47
    %s50 = sphi 0, %s49
    %s64 = sphi 0, %s50
    %s68 = sphi 0, %s68
    %s70 = sphi 0, %s68
    %s71 = sphi 0, %s70
    %s85 = sphi 0, %s71
    %s89 = sphi 0, %s89
    %s91 = sphi 0, %s89
    %s92 = sphi 0, %s91
    %s106 = sphi 0, %s92
    %s110 = sphi 0, %s110
    %s112 = sphi 0, %s110
    %s113 = sphi 0, %s112
    %s127 = sphi 0, %s113
    %s131 = sphi 0, %s131
    %s133 = sphi 0, %s131
    %s134 = sphi 0, %s133
    %s148 = sphi 0, %s134
    %s152 = sphi 0, %s152
    %s154 = sphi 0, %s152
    %s155 = sphi 0, %s154
    %s169 = sphi 0, %s155
    %s175 = sphi 0, %s177
    %s178 = sphi 0, %s175
    %s179 = sphi 0, %s178
    %s195 = sphi 0, %s179
  $region4: #{dual_qnetwork_forward.2} parent=0 // loop_header_branch
    %16 = sbr.rel (%p14) target = $region8
  $region5: #{dual_qnetwork_forward.2} parent=0 // loop_body
    %s18 = ssub.s32 %s13, 1
    %s19 = ssub.s32 %s13, 2
    %s20 = sadd.s32 %s13, 1
    %s21 = ssub.s32 %s13, %s20
    %p22 = scmp.eq.s32.totalorder %s21, 0
    %s24 = sadd.s32 %s23, 1
    %s25 = scalar_select %p22, %s23, %s24
    %p28 = pneg %p22
    %p29 = scmp.eq.s32.totalorder %s13, 1
    %p30 = por %p28, %p29
    %p31 = scmp.ne.s32.totalorder %s23, %s26
    %p32 = scmp.eq.s32.totalorder %s13, 0
    %p33 = por %p31, %p32
    %p34 = scmp.ne.s32.totalorder %s23, %s26
    %p35 = scmp.eq.s32.totalorder %s18, 1
    %p36 = por %p34, %p35
    %p37 = scmp.ne.s32.totalorder %s26, %s27
    %p38 = scmp.eq.s32.totalorder %s18, 0
    %p39 = por %p37, %p38
    %p40 = scmp.ne.s32.totalorder %s26, %s27
    %p41 = scmp.eq.s32.totalorder %s19, 1
    %p42 = por %p40, %p41
    %p44 = scmp.ne.s32.totalorder %s27, %s43
    %p45 = scmp.eq.s32.totalorder %s19, 0
    %p46 = por %p44, %p45
    %s48 = sadd.s32 %s47, 1
    %p51 = scmp.eq.s32.totalorder %s13, 1
    %p52 = scmp.ne.s32.totalorder %s47, %s49
    %p53 = scmp.eq.s32.totalorder %s13, 0
    %p54 = por %p52, %p53
    %p55 = scmp.ne.s32.totalorder %s47, %s49
    %p56 = scmp.eq.s32.totalorder %s18, 1
    %p57 = por %p55, %p56
    %p58 = scmp.ne.s32.totalorder %s49, %s50
    %p59 = scmp.eq.s32.totalorder %s18, 0
    %p60 = por %p58, %p59
    %p61 = scmp.ne.s32.totalorder %s49, %s50
    %p62 = scmp.eq.s32.totalorder %s19, 1
    %p63 = por %p61, %p62
    %p65 = scmp.ne.s32.totalorder %s50, %s64
    %p66 = scmp.eq.s32.totalorder %s19, 0
    %p67 = por %p65, %p66
    %s69 = sadd.s32 %s68, 1
    %p72 = scmp.eq.s32.totalorder %s13, 1
    %p73 = scmp.ne.s32.totalorder %s68, %s70
    %p74 = scmp.eq.s32.totalorder %s13, 0
    %p75 = por %p73, %p74
    %p76 = scmp.ne.s32.totalorder %s68, %s70
    %p77 = scmp.eq.s32.totalorder %s18, 1
    %p78 = por %p76, %p77
    %p79 = scmp.ne.s32.totalorder %s70, %s71
    %p80 = scmp.eq.s32.totalorder %s18, 0
    %p81 = por %p79, %p80
    %p82 = scmp.ne.s32.totalorder %s70, %s71
    %p83 = scmp.eq.s32.totalorder %s19, 1
    %p84 = por %p82, %p83
    %p86 = scmp.ne.s32.totalorder %s71, %s85
    %p87 = scmp.eq.s32.totalorder %s19, 0
    %p88 = por %p86, %p87
    %s90 = sadd.s32 %s89, 1
    %p93 = scmp.eq.s32.totalorder %s13, 1
    %p94 = scmp.ne.s32.totalorder %s89, %s91
    %p95 = scmp.eq.s32.totalorder %s13, 0
    %p96 = por %p94, %p95
    %p97 = scmp.ne.s32.totalorder %s89, %s91
    %p98 = scmp.eq.s32.totalorder %s18, 1
    %p99 = por %p97, %p98
    %p100 = scmp.ne.s32.totalorder %s91, %s92
    %p101 = scmp.eq.s32.totalorder %s18, 0
    %p102 = por %p100, %p101
    %p103 = scmp.ne.s32.totalorder %s91, %s92
    %p104 = scmp.eq.s32.totalorder %s19, 1
    %p105 = por %p103, %p104
    %p107 = scmp.ne.s32.totalorder %s92, %s106
    %p108 = scmp.eq.s32.totalorder %s19, 0
    %p109 = por %p107, %p108
    %s111 = sadd.s32 %s110, 1
    %p114 = scmp.eq.s32.totalorder %s13, 1
    %p115 = scmp.ne.s32.totalorder %s110, %s112
    %p116 = scmp.eq.s32.totalorder %s13, 0
    %p117 = por %p115, %p116
    %p118 = scmp.ne.s32.totalorder %s110, %s112
    %p119 = scmp.eq.s32.totalorder %s18, 1
    %p120 = por %p118, %p119
    %p121 = scmp.ne.s32.totalorder %s112, %s113
    %p122 = scmp.eq.s32.totalorder %s18, 0
    %p123 = por %p121, %p122
    %p124 = scmp.ne.s32.totalorder %s112, %s113
    %p125 = scmp.eq.s32.totalorder %s19, 1
    %p126 = por %p124, %p125
    %p128 = scmp.ne.s32.totalorder %s113, %s127
    %p129 = scmp.eq.s32.totalorder %s19, 0
    %p130 = por %p128, %p129
    %s132 = sadd.s32 %s131, 1
    %p135 = scmp.eq.s32.totalorder %s13, 1
    %p136 = scmp.ne.s32.totalorder %s131, %s133
    %p137 = scmp.eq.s32.totalorder %s13, 0
    %p138 = por %p136, %p137
    %p139 = scmp.ne.s32.totalorder %s131, %s133
    %p140 = scmp.eq.s32.totalorder %s18, 1
    %p141 = por %p139, %p140
    %p142 = scmp.ne.s32.totalorder %s133, %s134
    %p143 = scmp.eq.s32.totalorder %s18, 0
    %p144 = por %p142, %p143
    %p145 = scmp.ne.s32.totalorder %s133, %s134
    %p146 = scmp.eq.s32.totalorder %s19, 1
    %p147 = por %p145, %p146
    %p149 = scmp.ne.s32.totalorder %s134, %s148
    %p150 = scmp.eq.s32.totalorder %s19, 0
    %p151 = por %p149, %p150
    %s153 = sadd.s32 %s152, 1
    %p156 = scmp.eq.s32.totalorder %s13, 1
    %p157 = scmp.ne.s32.totalorder %s152, %s154
    %p158 = scmp.eq.s32.totalorder %s13, 0
    %p159 = por %p157, %p158
    %p160 = scmp.ne.s32.totalorder %s152, %s154
    %p161 = scmp.eq.s32.totalorder %s18, 1
    %p162 = por %p160, %p161
    %p163 = scmp.ne.s32.totalorder %s154, %s155
    %p164 = scmp.eq.s32.totalorder %s18, 0
    %p165 = por %p163, %p164
    %p166 = scmp.ne.s32.totalorder %s154, %s155
    %p167 = scmp.eq.s32.totalorder %s19, 1
    %p168 = por %p166, %p167
    %p170 = scmp.ne.s32.totalorder %s155, %s169
    %p171 = scmp.eq.s32.totalorder %s19, 0
    %p172 = por %p170, %p171
    %s173 = ssub.s32 %s13, %s20
    %p174 = scmp.eq.s32.totalorder %s173, 0
    %s176 = sadd.s32 %s175, 1
    %s177 = scalar_select %p174, %s175, %s176
    %p180 = pneg %p174
    %p181 = scmp.eq.s32.totalorder %s13, 1
    %p182 = por %p180, %p181
    %p183 = scmp.ne.s32.totalorder %s175, %s178
    %p184 = scmp.eq.s32.totalorder %s13, 0
    %p185 = por %p183, %p184
    %p186 = scmp.ne.s32.totalorder %s175, %s178
    %p187 = scmp.eq.s32.totalorder %s18, 1
    %p188 = por %p186, %p187
    %p189 = scmp.ne.s32.totalorder %s178, %s179
    %p190 = scmp.eq.s32.totalorder %s18, 0
    %p191 = por %p189, %p190
    %p192 = scmp.ne.s32.totalorder %s178, %s179
    %p193 = scmp.eq.s32.totalorder %s19, 1
    %p194 = por %p192, %p193
    %p196 = scmp.ne.s32.totalorder %s179, %s195
    %p197 = scmp.eq.s32.totalorder %s19, 0
    %p198 = por %p196, %p197
    %p199 = scmp.le.s32.totalorder 1, %s13
    %p200 = scmp.lt.s32.totalorder %s13, 3
    %p201 = pnand %p199, %p200
    %p202 = pneg %p201
    // Predicated region
    $region9: #{dual_qnetwork_forward.2} parent=5 // pred_check
      _
    $region10: #{dual_qnetwork_forward.2} parent=5 // pred_check_branch
      %204 = sbr.rel (%p201) target = $region12
    $region11: #{dual_qnetwork_forward.2} parent=5 // pred_region
      %s205 = ssub.s32 %s13, 1
      // Predicated region
      $region13: #{dual_qnetwork_forward.2} parent=11 // pred_check
        %p206 = pneg %p60
      $region14: #{dual_qnetwork_forward.2} parent=11 // pred_check_branch
        %208 = sbr.rel (%p206) target = $region16
      $region15: #{dual_qnetwork_forward.2} parent=11 // pred_region
        _
      $region16: #{dual_qnetwork_forward.2} parent=11 // pred_fallthru
        _
      // Predicated region
      $region17: #{dual_qnetwork_forward.2} parent=11 // pred_check
        %p209 = pneg %p81
      $region18: #{dual_qnetwork_forward.2} parent=11 // pred_check_branch
        %211 = sbr.rel (%p209) target = $region20
      $region19: #{dual_qnetwork_forward.2} parent=11 // pred_region
        _
      $region20: #{dual_qnetwork_forward.2} parent=11 // pred_fallthru
        _
      // Predicated region
      $region21: #{dual_qnetwork_forward.2} parent=11 // pred_check
        %p212 = pneg %p102
      $region22: #{dual_qnetwork_forward.2} parent=11 // pred_check_branch
        %214 = sbr.rel (%p212) target = $region24
      $region23: #{dual_qnetwork_forward.2} parent=11 // pred_region
        _
      $region24: #{dual_qnetwork_forward.2} parent=11 // pred_fallthru
        _
      // Predicated region
      $region25: #{dual_qnetwork_forward.2} parent=11 // pred_check
        %p215 = pneg %p123
      $region26: #{dual_qnetwork_forward.2} parent=11 // pred_check_branch
        %217 = sbr.rel (%p215) target = $region28
      $region27: #{dual_qnetwork_forward.2} parent=11 // pred_region
        _
      $region28: #{dual_qnetwork_forward.2} parent=11 // pred_fallthru
        _
      // Predicated region
      $region29: #{dual_qnetwork_forward.2} parent=11 // pred_check
        %p218 = pneg %p144
      $region30: #{dual_qnetwork_forward.2} parent=11 // pred_check_branch
        %220 = sbr.rel (%p218) target = $region32
      $region31: #{dual_qnetwork_forward.2} parent=11 // pred_region
        _
      $region32: #{dual_qnetwork_forward.2} parent=11 // pred_fallthru
        _
      // Predicated region
      $region33: #{dual_qnetwork_forward.2} parent=11 // pred_check
        %p221 = pneg %p165
      $region34: #{dual_qnetwork_forward.2} parent=11 // pred_check_branch
        %223 = sbr.rel (%p221) target = $region36
      $region35: #{dual_qnetwork_forward.2} parent=11 // pred_region
        _
      $region36: #{dual_qnetwork_forward.2} parent=11 // pred_fallthru
        _
    $region12: #{dual_qnetwork_forward.2} parent=5 // pred_fallthru
      _
    %p224 = scmp.lt.s32.totalorder %s13, 2
    // Predicated region
    $region37: #{dual_qnetwork_forward.2} parent=5 // pred_check
      %p225 = pneg %p224
    $region38: #{dual_qnetwork_forward.2} parent=5 // pred_check_branch
      %227 = sbr.rel (%p225) target = $region40
    $region39: #{dual_qnetwork_forward.2} parent=5 // pred_region
      // Predicated region
      $region41: #{dual_qnetwork_forward.2} parent=39 // pred_check
        %p228 = pneg %p33
      $region42: #{dual_qnetwork_forward.2} parent=39 // pred_check_branch
        %230 = sbr.rel (%p228) target = $region44
      $region43: #{dual_qnetwork_forward.2} parent=39 // pred_region
        %s231 = smul.u32 16, %s13
        %p232 = scmp.lt.s32.totalorder %s231, 31
        %s233 = scalar_select %p232, %s231, 31
        %s234 = smul.addr %s233, 8
        %s235 = scalar_lea.vmem %s0, %s234
        %s236 = smul.u32 16, %s13
      $region44: #{dual_qnetwork_forward.2} parent=39 // pred_fallthru
        _
    $region40: #{dual_qnetwork_forward.2} parent=5 // pred_fallthru
      _
    %p237 = scmp.le.s32.totalorder 1, %s13
    %p238 = scmp.lt.s32.totalorder %s13, 3
    %p239 = pnand %p237, %p238
    %p240 = pneg %p239
    // Predicated region
    $region45: #{dual_qnetwork_forward.2} parent=5 // pred_check
      _
    $region46: #{dual_qnetwork_forward.2} parent=5 // pred_check_branch
      %242 = sbr.rel (%p239) target = $region48
    $region47: #{dual_qnetwork_forward.2} parent=5 // pred_region
      %s243 = ssub.s32 %s13, 1
      %s244 = smul.u32 16, %s18
      %p245 = scmp.lt.s32.totalorder %s244, 31
      %s246 = scalar_select %p245, %s244, 31
      %s247 = smul.addr %s246, 8
      %s248 = scalar_lea.vmem %s0, %s247
      %p249 = pneg %p39
      %p250 = pneg %p36
      %p251 = pneg %p60
      %p252 = pneg %p57
      %p253 = pneg %p81
      %p254 = pneg %p78
      %p255 = pneg %p102
      %p256 = pneg %p99
      %p257 = pneg %p123
      %p258 = pneg %p120
      %p259 = pneg %p144
      %p260 = pneg %p141
      %p261 = pneg %p165
      %p262 = pneg %p162
      %p263 = pneg %p191
      %p264 = pneg %p188
      %s265 = smul.u32 16, %s18
      %p266 = scmp.lt.s32.totalorder %s265, 31
      %s267 = scalar_select %p266, %s265, 31
      %s268 = smul.addr %s267, 8
      %s269 = scalar_lea.vmem %s7, %s268
      %s270 = smul.u32 16, %s18
      %p271 = scmp.lt.s32.totalorder %s270, 31
      %s272 = scalar_select %p271, %s270, 31
      %s273 = smul.addr %s272, 8
      %s274 = scalar_lea.vmem %s0, %s273
      %s275 = smul.u32 16, %s18
      %s276 = smul.u32 16, %s18
      %p277 = scmp.lt.s32.totalorder %s276, 31
      %s278 = scalar_select %p277, %s276, 31
      %s279 = smul.addr %s278, 8
      %s280 = scalar_lea.vmem %s7, %s279
      %s281 = smul.u32 16, %s18
      %v283 = vld [vmem:[%s274] sm:$0xff]
      %v284 = vld [vmem:[%s274 + $0x8] sm:$0xff]
      %v285 = vld [vmem:[%s274 + $0x10] sm:$0xff]
      %v286 = vld [vmem:[%s274 + $0x18] sm:$0xff]
      %v287 = vld [vmem:[%s274 + $0x20] sm:$0xff]
      %v288 = vld [vmem:[%s274 + $0x28] sm:$0xff]
      %v289 = vld [vmem:[%s274 + $0x30] sm:$0xff]
      %v290 = vld [vmem:[%s274 + $0x38] sm:$0xff]
      %v291 = vld [vmem:[%s274 + $0x40] sm:$0xff]
      %v292 = vld [vmem:[%s274 + $0x48] sm:$0xff]
      %v293 = vld [vmem:[%s274 + $0x50] sm:$0xff]
      %v294 = vld [vmem:[%s274 + $0x58] sm:$0xff]
      %v295 = vld [vmem:[%s274 + $0x60] sm:$0xff]
      %v296 = vld [vmem:[%s274 + $0x68] sm:$0xff]
      %v297 = vld [vmem:[%s274 + $0x70] sm:$0xff]
      %v298 = vld [vmem:[%s274 + $0x78] sm:$0xff]
      %v299 = vpack.c.bf16 %v284, %v283
      %v300 = vpack.c.bf16 %v286, %v285
      %v301 = vpack.c.bf16 %v288, %v287
      %v302 = vpack.c.bf16 %v290, %v289
      %v303 = vpack.c.bf16 %v292, %v291
      %v304 = vpack.c.bf16 %v294, %v293
      %v305 = vpack.c.bf16 %v296, %v295
      %v306 = vpack.c.bf16 %v298, %v297
      %v307 = vld [vmem:[%s1] sm:$0xf]
      %v308 = vld [vmem:[%s1 + $0x4] sm:$0xf]
      %v309 = vld [vmem:[%s2] sm:$0x1]
      %v311 = vlaneseq
      %v312 = vshrl.u32 %v311, 7
      %v313 = vsub.s32 0, %v312
      %v314 = vrot.slane %v309, %v313
      %v318 = vunpack.c.l.b16 %v307
      %v319 = vunpack.c.l.b16 %v308
      %v320 = vpack.c.b16 %v319, %v318
      %vm322 = vcmask 130048
      %v324 = vsel %vm322, %v299, 0
      %v327 = vsel %vm322, %v300, 0
      %v330 = vsel %vm322, %v301, 0
      %v333 = vsel %vm322, %v302, 0
      %v336 = vsel %vm322, %v303, 0
      %v339 = vsel %vm322, %v304, 0
      %v342 = vsel %vm322, %v305, 0
      %v345 = vsel %vm322, %v306, 0
      %347 = vmatprep.subr.bf16.mxu0 0
      %348 = vmatpush1.bf16.msra.mxu0 %v320
      %349 = vmatprep.subr.bf16.mxu0 0
      %350 = vmatpush1.bf16.msra.mxu0 0
      %351 = vmatprep.subr.bf16.mxu0 0
      %352 = vmatpush1.bf16.msra.mxu0 0
      %353 = vmatprep.subr.bf16.mxu0 0
      %354 = vmatpush1.bf16.msra.mxu0 0
      %355 = vmatprep.subr.bf16.mxu0 0
      %356 = vmatpush1.bf16.msra.mxu0 0
      %357 = vmatprep.subr.bf16.mxu0 0
      %358 = vmatpush1.bf16.msra.mxu0 0
      %359 = vmatprep.subr.bf16.mxu0 0
      %360 = vmatpush1.bf16.msra.mxu0 0
      %361 = vmatprep.subr.bf16.mxu0 0
      %362 = vmatpush1.bf16.msra.mxu0 0
      %363 = vmatprep.subr.bf16.mxu0 0
      %364 = vmatpush1.bf16.msra.mxu0 0
      %365 = vmatprep.subr.bf16.mxu0 0
      %366 = vmatpush1.bf16.msra.mxu0 0
      %367 = vmatprep.subr.bf16.mxu0 0
      %368 = vmatpush1.bf16.msra.mxu0 0
      %369 = vmatprep.subr.bf16.mxu0 0
      %370 = vmatpush1.bf16.msra.mxu0 0
      %371 = vmatprep.subr.bf16.mxu0 0
      %372 = vmatpush1.bf16.msra.mxu0 0
      %373 = vmatprep.subr.bf16.mxu0 0
      %374 = vmatpush1.bf16.msra.mxu0 0
      %375 = vmatprep.subr.bf16.mxu0 0
      %376 = vmatpush1.bf16.msra.mxu0 0
      %377 = vmatprep.subr.bf16.mxu0 0
      %378 = vmatpush1.bf16.msra.mxu0 0
      %379 = vmatprep.mubr.bf16.mxu0 0
      %380 = vmatmul.mubr.bf16.gmra.mrb[0].mxu0 %v324
      %v381 = vpop.f32.mrb[0].mxu0
      %v382 = vadd.f32 %v314, %v381
      %v383 = vpop.f32.mrb[0].mxu0
      %v384 = vpop.f32.mrb[0].mxu0
      %v385 = vadd.f32 %v314, %v384
      %v386 = vpop.f32.mrb[0].mxu0
      %387 = vmatprep.mubr.bf16.mxu0 0
      %388 = vmatmul.mubr.bf16.gmra.mrb[0].mxu0 %v327
      %v389 = vpop.f32.mrb[0].mxu0
      %v390 = vadd.f32 %v314, %v389
      %v391 = vpop.f32.mrb[0].mxu0
      %v392 = vpop.f32.mrb[0].mxu0
      %v393 = vadd.f32 %v314, %v392
      %v394 = vpop.f32.mrb[0].mxu0
      %395 = vmatprep.mubr.bf16.mxu0 0
      %396 = vmatmul.mubr.bf16.gmra.mrb[0].mxu0 %v330
      %v397 = vpop.f32.mrb[0].mxu0
      %v398 = vadd.f32 %v314, %v397
      %v399 = vpop.f32.mrb[0].mxu0
      %v400 = vpop.f32.mrb[0].mxu0
      %v401 = vadd.f32 %v314, %v400
      %v402 = vpop.f32.mrb[0].mxu0
      %403 = vmatprep.mubr.bf16.mxu0 0
      %404 = vmatmul.mubr.bf16.gmra.mrb[0].mxu0 %v333
      %v405 = vpop.f32.mrb[0].mxu0
      %v406 = vadd.f32 %v314, %v405
      %v407 = vpop.f32.mrb[0].mxu0
      %v408 = vpop.f32.mrb[0].mxu0
      %v409 = vadd.f32 %v314, %v408
      %v410 = vpop.f32.mrb[0].mxu0
      %411 = vmatprep.mubr.bf16.mxu0 0
      %412 = vmatmul.mubr.bf16.gmra.mrb[0].mxu0 %v336
      %v413 = vpop.f32.mrb[0].mxu0
      %v414 = vadd.f32 %v314, %v413
      %v415 = vpop.f32.mrb[0].mxu0
      %v416 = vpop.f32.mrb[0].mxu0
      %v417 = vadd.f32 %v314, %v416
      %v418 = vpop.f32.mrb[0].mxu0
      %419 = vmatprep.mubr.bf16.mxu0 0
      %420 = vmatmul.mubr.bf16.gmra.mrb[0].mxu0 %v339
      %v421 = vpop.f32.mrb[0].mxu0
      %v422 = vadd.f32 %v314, %v421
      %v423 = vpop.f32.mrb[0].mxu0
      %v424 = vpop.f32.mrb[0].mxu0
      %v425 = vadd.f32 %v314, %v424
      %v426 = vpop.f32.mrb[0].mxu0
      %427 = vmatprep.mubr.bf16.mxu0 0
      %428 = vmatmul.mubr.bf16.gmra.mrb[0].mxu0 %v342
      %v429 = vpop.f32.mrb[0].mxu0
      %v430 = vadd.f32 %v314, %v429
      %v431 = vpop.f32.mrb[0].mxu0
      %v432 = vpop.f32.mrb[0].mxu0
      %v433 = vadd.f32 %v314, %v432
      %v434 = vpop.f32.mrb[0].mxu0
      %435 = vmatprep.mubr.bf16.mxu0 0
      %436 = vmatmul.mubr.bf16.gmra.mrb[0].mxu0 %v345
      %v437 = vpop.f32.mrb[0].mxu0
      %v438 = vadd.f32 %v314, %v437
      %v439 = vpop.f32.mrb[0].mxu0
      %v440 = vpop.f32.mrb[0].mxu0
      %v441 = vadd.f32 %v314, %v440
      %v442 = vpop.f32.mrb[0].mxu0
      %443 = vdwg.mxu0
      %v444 = vmax.f32 %v382, 0.0
      %v445 = vmax.f32 %v385, 0.0
      %v446 = vmax.f32 %v390, 0.0
      %v447 = vmax.f32 %v393, 0.0
      %v448 = vmax.f32 %v398, 0.0
      %v449 = vmax.f32 %v401, 0.0
      %v450 = vmax.f32 %v406, 0.0
      %v451 = vmax.f32 %v409, 0.0
      %v452 = vmax.f32 %v414, 0.0
      %v453 = vmax.f32 %v417, 0.0
      %v454 = vmax.f32 %v422, 0.0
      %v455 = vmax.f32 %v425, 0.0
      %v456 = vmax.f32 %v430, 0.0
      %v457 = vmax.f32 %v433, 0.0
      %v458 = vmax.f32 %v438, 0.0
      %v459 = vmax.f32 %v441, 0.0
      %v460 = vpack.c.bf16 %v445, %v444
      %v461 = vpack.c.bf16 %v447, %v446
      %v462 = vpack.c.bf16 %v449, %v448
      %v463 = vpack.c.bf16 %v451, %v450
      %v464 = vpack.c.bf16 %v453, %v452
      %v465 = vpack.c.bf16 %v455, %v454
      %v466 = vpack.c.bf16 %v457, %v456
      %v467 = vpack.c.bf16 %v459, %v458
      %v468 = vld [vmem:[%s3] sm:$0xf]
      %v469 = vld [vmem:[%s3 + $0x4] sm:$0xf]
      %v470 = vld [vmem:[%s3 + $0x8] sm:$0xf]
      %v471 = vld [vmem:[%s3 + $0xc] sm:$0xf]
      %v472 = vld [vmem:[%s3 + $0x10] sm:$0xf]
      %v473 = vld [vmem:[%s3 + $0x14] sm:$0xf]
      %v474 = vld [vmem:[%s3 + $0x18] sm:$0xf]
      %v475 = vld [vmem:[%s3 + $0x1c] sm:$0xf]
      %v476 = vld [vmem:[%s4] sm:$0x1]
      %v478 = vlaneseq
      %v479 = vshrl.u32 %v478, 7
      %v480 = vsub.s32 0, %v479
      %v481 = vrot.slane %v476, %v480
      %v491 = vunpack.c.l.b16 %v468
      %v492 = vunpack.c.l.b16 %v469
      %v493 = vunpack.c.l.b16 %v470
      %v494 = vunpack.c.l.b16 %v471
      %v495 = vunpack.c.l.b16 %v472
      %v496 = vunpack.c.l.b16 %v473
      %v497 = vunpack.c.l.b16 %v474
      %v498 = vunpack.c.l.b16 %v475
      %v499 = vpack.c.b16 %v492, %v491
      %v500 = vpack.c.b16 %v494, %v493
      %v501 = vpack.c.b16 %v496, %v495
      %v502 = vpack.c.b16 %v498, %v497
      %vm507 = vcmask 523264
      %v509 = vsel %vm507, %v460, 0
      %v512 = vsel %vm507, %v461, 0
      %v515 = vsel %vm507, %v462, 0
      %v518 = vsel %vm507, %v463, 0
      %v521 = vsel %vm507, %v464, 0
      %v524 = vsel %vm507, %v465, 0
      %v527 = vsel %vm507, %v466, 0
      %v530 = vsel %vm507, %v467, 0
      %532 = vmatprep.subr.bf16.mxu0 0
      %533 = vmatpush1.bf16.msra.mxu0 %v499
      %534 = vmatprep.subr.bf16.mxu0 0
      %535 = vmatpush1.bf16.msra.mxu0 %v500
      %536 = vmatprep.subr.bf16.mxu0 0
      %537 = vmatpush1.bf16.msra.mxu0 %v501
      %538 = vmatprep.subr.bf16.mxu0 0
      %539 = vmatpush1.bf16.msra.mxu0 %v502
      %540 = vmatprep.subr.bf16.mxu0 0
      %541 = vmatpush1.bf16.msra.mxu0 0
      %542 = vmatprep.subr.bf16.mxu0 0
      %543 = vmatpush1.bf16.msra.mxu0 0
      %544 = vmatprep.subr.bf16.mxu0 0
      %545 = vmatpush1.bf16.msra.mxu0 0
      %546 = vmatprep.subr.bf16.mxu0 0
      %547 = vmatpush1.bf16.msra.mxu0 0
      %548 = vmatprep.subr.bf16.mxu0 0
      %549 = vmatpush1.bf16.msra.mxu0 0
      %550 = vmatprep.subr.bf16.mxu0 0
      %551 = vmatpush1.bf16.msra.mxu0 0
      %552 = vmatprep.subr.bf16.mxu0 0
      %553 = vmatpush1.bf16.msra.mxu0 0
      %554 = vmatprep.subr.bf16.mxu0 0
      %555 = vmatpush1.bf16.msra.mxu0 0
      %556 = vmatprep.subr.bf16.mxu0 0
      %557 = vmatpush1.bf16.msra.mxu0 0
      %558 = vmatprep.subr.bf16.mxu0 0
      %559 = vmatpush1.bf16.msra.mxu0 0
      %560 = vmatprep.subr.bf16.mxu0 0
      %561 = vmatpush1.bf16.msra.mxu0 0
      %562 = vmatprep.subr.bf16.mxu0 0
      %563 = vmatpush1.bf16.msra.mxu0 0
      %564 = vmatprep.mubr.bf16.mxu0 0
      %565 = vmatmul.mubr.bf16.gmra.mrb[0].mxu0 %v509
      %v566 = vpop.f32.mrb[0].mxu0
      %v567 = vadd.f32 %v481, %v566
      %v568 = vpop.f32.mrb[0].mxu0
      %v569 = vpop.f32.mrb[0].mxu0
      %v570 = vadd.f32 %v481, %v569
      %v571 = vpop.f32.mrb[0].mxu0
      %572 = vmatprep.mubr.bf16.mxu0 0
      %573 = vmatmul.mubr.bf16.gmra.mrb[0].mxu0 %v512
      %v574 = vpop.f32.mrb[0].mxu0
      %v575 = vadd.f32 %v481, %v574
      %v576 = vpop.f32.mrb[0].mxu0
      %v577 = vpop.f32.mrb[0].mxu0
      %v578 = vadd.f32 %v481, %v577
      %v579 = vpop.f32.mrb[0].mxu0
      %580 = vmatprep.mubr.bf16.mxu0 0
      %581 = vmatmul.mubr.bf16.gmra.mrb[0].mxu0 %v515
      %v582 = vpop.f32.mrb[0].mxu0
      %v583 = vadd.f32 %v481, %v582
      %v584 = vpop.f32.mrb[0].mxu0
      %v585 = vpop.f32.mrb[0].mxu0
      %v586 = vadd.f32 %v481, %v585
      %v587 = vpop.f32.mrb[0].mxu0
      %588 = vmatprep.mubr.bf16.mxu0 0
      %589 = vmatmul.mubr.bf16.gmra.mrb[0].mxu0 %v518
      %v590 = vpop.f32.mrb[0].mxu0
      %v591 = vadd.f32 %v481, %v590
      %v592 = vpop.f32.mrb[0].mxu0
      %v593 = vpop.f32.mrb[0].mxu0
      %v594 = vadd.f32 %v481, %v593
      %v595 = vpop.f32.mrb[0].mxu0
      %596 = vmatprep.mubr.bf16.mxu0 0
      %597 = vmatmul.mubr.bf16.gmra.mrb[0].mxu0 %v521
      %v598 = vpop.f32.mrb[0].mxu0
      %v599 = vadd.f32 %v481, %v598
      %v600 = vpop.f32.mrb[0].mxu0
      %v601 = vpop.f32.mrb[0].mxu0
      %v602 = vadd.f32 %v481, %v601
      %v603 = vpop.f32.mrb[0].mxu0
      %604 = vmatprep.mubr.bf16.mxu0 0
      %605 = vmatmul.mubr.bf16.gmra.mrb[0].mxu0 %v524
      %v606 = vpop.f32.mrb[0].mxu0
      %v607 = vadd.f32 %v481, %v606
      %v608 = vpop.f32.mrb[0].mxu0
      %v609 = vpop.f32.mrb[0].mxu0
      %v610 = vadd.f32 %v481, %v609
      %v611 = vpop.f32.mrb[0].mxu0
      %612 = vmatprep.mubr.bf16.mxu0 0
      %613 = vmatmul.mubr.bf16.gmra.mrb[0].mxu0 %v527
      %v614 = vpop.f32.mrb[0].mxu0
      %v615 = vadd.f32 %v481, %v614
      %v616 = vpop.f32.mrb[0].mxu0
      %v617 = vpop.f32.mrb[0].mxu0
      %v618 = vadd.f32 %v481, %v617
      %v619 = vpop.f32.mrb[0].mxu0
      %620 = vmatprep.mubr.bf16.mxu0 0
      %621 = vmatmul.mubr.bf16.gmra.mrb[0].mxu0 %v530
      %v622 = vpop.f32.mrb[0].mxu0
      %v623 = vadd.f32 %v481, %v622
      %v624 = vpop.f32.mrb[0].mxu0
      %v625 = vpop.f32.mrb[0].mxu0
      %v626 = vadd.f32 %v481, %v625
      %v627 = vpop.f32.mrb[0].mxu0
      %628 = vdwg.mxu0
      %v629 = vmax.f32 %v567, 0.0
      %v630 = vmax.f32 %v570, 0.0
      %v631 = vmax.f32 %v575, 0.0
      %v632 = vmax.f32 %v578, 0.0
      %v633 = vmax.f32 %v583, 0.0
      %v634 = vmax.f32 %v586, 0.0
      %v635 = vmax.f32 %v591, 0.0
      %v636 = vmax.f32 %v594, 0.0
      %v637 = vmax.f32 %v599, 0.0
      %v638 = vmax.f32 %v602, 0.0
      %v639 = vmax.f32 %v607, 0.0
      %v640 = vmax.f32 %v610, 0.0
      %v641 = vmax.f32 %v615, 0.0
      %v642 = vmax.f32 %v618, 0.0
      %v643 = vmax.f32 %v623, 0.0
      %v644 = vmax.f32 %v626, 0.0
      %v645 = vpack.c.bf16 %v630, %v629
      %v646 = vpack.c.bf16 %v632, %v631
      %v647 = vpack.c.bf16 %v634, %v633
      %v648 = vpack.c.bf16 %v636, %v635
      %v649 = vpack.c.bf16 %v638, %v637
      %v650 = vpack.c.bf16 %v640, %v639
      %v651 = vpack.c.bf16 %v642, %v641
      %v652 = vpack.c.bf16 %v644, %v643
      %v653 = vld [vmem:[%s5] sm:$0xf]
      %v654 = vld [vmem:[%s5 + $0x4] sm:$0xf]
      %v655 = vld [vmem:[%s5 + $0x8] sm:$0xf]
      %v656 = vld [vmem:[%s5 + $0xc] sm:$0xf]
      %v657 = vld [vmem:[%s5 + $0x10] sm:$0xf]
      %v658 = vld [vmem:[%s5 + $0x14] sm:$0xf]
      %v659 = vld [vmem:[%s5 + $0x18] sm:$0xf]
      %v660 = vld [vmem:[%s5 + $0x1c] sm:$0xf]
      %v661 = vld [vmem:[%s5 + $0x20] sm:$0xf]
      %v662 = vld [vmem:[%s5 + $0x24] sm:$0xf]
      %v663 = vld [vmem:[%s5 + $0x28] sm:$0xf]
      %v664 = vld [vmem:[%s5 + $0x2c] sm:$0xf]
      %v665 = vld [vmem:[%s5 + $0x30] sm:$0xf]
      %v666 = vld [vmem:[%s5 + $0x34] sm:$0xf]
      %v667 = vld [vmem:[%s5 + $0x38] sm:$0xf]
      %v668 = vld [vmem:[%s5 + $0x3c] sm:$0xf]
      %v669 = vld [vmem:[%s6] sm:$0x1]
      %v671 = vlaneseq
      %v672 = vshrl.u32 %v671, 7
      %v673 = vsub.s32 0, %v672
      %v674 = vrot.slane %v669, %v673
      %v692 = vunpack.c.l.b16 %v653
      %v693 = vunpack.c.l.b16 %v654
      %v694 = vunpack.c.l.b16 %v655
      %v695 = vunpack.c.l.b16 %v656
      %v696 = vunpack.c.l.b16 %v657
      %v697 = vunpack.c.l.b16 %v658
      %v698 = vunpack.c.l.b16 %v659
      %v699 = vunpack.c.l.b16 %v660
      %v700 = vunpack.c.l.b16 %v661
      %v701 = vunpack.c.l.b16 %v662
      %v702 = vunpack.c.l.b16 %v663
      %v703 = vunpack.c.l.b16 %v664
      %v704 = vunpack.c.l.b16 %v665
      %v705 = vunpack.c.l.b16 %v666
      %v706 = vunpack.c.l.b16 %v667
      %v707 = vunpack.c.l.b16 %v668
      %v708 = vpack.c.b16 %v693, %v692
      %v709 = vpack.c.b16 %v695, %v694
      %v710 = vpack.c.b16 %v697, %v696
      %v711 = vpack.c.b16 %v699, %v698
      %v712 = vpack.c.b16 %v701, %v700
      %v713 = vpack.c.b16 %v703, %v702
      %v714 = vpack.c.b16 %v705, %v704
      %v715 = vpack.c.b16 %v707, %v706
      %724 = vmatprep.subr.bf16.mxu0 0
      %725 = vmatpush1.bf16.msra.mxu0 %v708
      %726 = vmatprep.subr.bf16.mxu0 0
      %727 = vmatpush1.bf16.msra.mxu0 %v709
      %728 = vmatprep.subr.bf16.mxu0 0
      %729 = vmatpush1.bf16.msra.mxu0 %v710
      %730 = vmatprep.subr.bf16.mxu0 0
      %731 = vmatpush1.bf16.msra.mxu0 %v711
      %732 = vmatprep.subr.bf16.mxu0 0
      %733 = vmatpush1.bf16.msra.mxu0 %v712
      %734 = vmatprep.subr.bf16.mxu0 0
      %735 = vmatpush1.bf16.msra.mxu0 %v713
      %736 = vmatprep.subr.bf16.mxu0 0
      %737 = vmatpush1.bf16.msra.mxu0 %v714
      %738 = vmatprep.subr.bf16.mxu0 0
      %739 = vmatpush1.bf16.msra.mxu0 %v715
      %740 = vmatprep.subr.bf16.mxu0 0
      %741 = vmatpush1.bf16.msra.mxu0 0
      %742 = vmatprep.subr.bf16.mxu0 0
      %743 = vmatpush1.bf16.msra.mxu0 0
      %744 = vmatprep.subr.bf16.mxu0 0
      %745 = vmatpush1.bf16.msra.mxu0 0
      %746 = vmatprep.subr.bf16.mxu0 0
      %747 = vmatpush1.bf16.msra.mxu0 0
      %748 = vmatprep.subr.bf16.mxu0 0
      %749 = vmatpush1.bf16.msra.mxu0 0
      %750 = vmatprep.subr.bf16.mxu0 0
      %751 = vmatpush1.bf16.msra.mxu0 0
      %752 = vmatprep.subr.bf16.mxu0 0
      %753 = vmatpush1.bf16.msra.mxu0 0
      %754 = vmatprep.subr.bf16.mxu0 0
      %755 = vmatpush1.bf16.msra.mxu0 0
      %756 = vmatprep.mubr.bf16.mxu0 0
      %757 = vmatmul.mubr.bf16.gmra.mrb[0].mxu0 %v645
      %v758 = vpop.f32.mrb[0].mxu0
      %v759 = vadd.f32 %v674, %v758
      %v760 = vpop.f32.mrb[0].mxu0
      %v761 = vpop.f32.mrb[0].mxu0
      %v762 = vadd.f32 %v674, %v761
      %v763 = vpop.f32.mrb[0].mxu0
      %764 = vmatprep.mubr.bf16.mxu0 0
      %765 = vmatmul.mubr.bf16.gmra.mrb[0].mxu0 %v646
      %v766 = vpop.f32.mrb[0].mxu0
      %v767 = vadd.f32 %v674, %v766
      %v768 = vpop.f32.mrb[0].mxu0
      %v769 = vpop.f32.mrb[0].mxu0
      %v770 = vadd.f32 %v674, %v769
      %v771 = vpop.f32.mrb[0].mxu0
      %772 = vmatprep.mubr.bf16.mxu0 0
      %773 = vmatmul.mubr.bf16.gmra.mrb[0].mxu0 %v647
      %v774 = vpop.f32.mrb[0].mxu0
      %v775 = vadd.f32 %v674, %v774
      %v776 = vpop.f32.mrb[0].mxu0
      %v777 = vpop.f32.mrb[0].mxu0
      %v778 = vadd.f32 %v674, %v777
      %v779 = vpop.f32.mrb[0].mxu0
      %780 = vmatprep.mubr.bf16.mxu0 0
      %781 = vmatmul.mubr.bf16.gmra.mrb[0].mxu0 %v648
      %v782 = vpop.f32.mrb[0].mxu0
      %v783 = vadd.f32 %v674, %v782
      %v784 = vpop.f32.mrb[0].mxu0
      %v785 = vpop.f32.mrb[0].mxu0
      %v786 = vadd.f32 %v674, %v785
      %v787 = vpop.f32.mrb[0].mxu0
      %788 = vmatprep.mubr.bf16.mxu0 0
      %789 = vmatmul.mubr.bf16.gmra.mrb[0].mxu0 %v649
      %v790 = vpop.f32.mrb[0].mxu0
      %v791 = vadd.f32 %v674, %v790
      %v792 = vpop.f32.mrb[0].mxu0
      %v793 = vpop.f32.mrb[0].mxu0
      %v794 = vadd.f32 %v674, %v793
      %v795 = vpop.f32.mrb[0].mxu0
      %796 = vmatprep.mubr.bf16.mxu0 0
      %797 = vmatmul.mubr.bf16.gmra.mrb[0].mxu0 %v650
      %v798 = vpop.f32.mrb[0].mxu0
      %v799 = vadd.f32 %v674, %v798
      %v800 = vpop.f32.mrb[0].mxu0
      %v801 = vpop.f32.mrb[0].mxu0
      %v802 = vadd.f32 %v674, %v801
      %v803 = vpop.f32.mrb[0].mxu0
      %804 = vmatprep.mubr.bf16.mxu0 0
      %805 = vmatmul.mubr.bf16.gmra.mrb[0].mxu0 %v651
      %v806 = vpop.f32.mrb[0].mxu0
      %v807 = vadd.f32 %v674, %v806
      %v808 = vpop.f32.mrb[0].mxu0
      %v809 = vpop.f32.mrb[0].mxu0
      %v810 = vadd.f32 %v674, %v809
      %v811 = vpop.f32.mrb[0].mxu0
      %812 = vmatprep.mubr.bf16.mxu0 0
      %813 = vmatmul.mubr.bf16.gmra.mrb[0].mxu0 %v652
      %v814 = vpop.f32.mrb[0].mxu0
      %v815 = vadd.f32 %v674, %v814
      %v816 = vpop.f32.mrb[0].mxu0
      %v817 = vpop.f32.mrb[0].mxu0
      %v818 = vadd.f32 %v674, %v817
      %v819 = vpop.f32.mrb[0].mxu0
      %820 = vdwg.mxu0
      %821 = vst [vmem:[%s280] sm:$0xff] %v759
      %822 = vst [vmem:[%s280 + $0x8] sm:$0xff] %v762
      %823 = vst [vmem:[%s280 + $0x10] sm:$0xff] %v767
      %824 = vst [vmem:[%s280 + $0x18] sm:$0xff] %v770
      %825 = vst [vmem:[%s280 + $0x20] sm:$0xff] %v775
      %826 = vst [vmem:[%s280 + $0x28] sm:$0xff] %v778
      %827 = vst [vmem:[%s280 + $0x30] sm:$0xff] %v783
      %828 = vst [vmem:[%s280 + $0x38] sm:$0xff] %v786
      %829 = vst [vmem:[%s280 + $0x40] sm:$0xff] %v791
      %830 = vst [vmem:[%s280 + $0x48] sm:$0xff] %v794
      %831 = vst [vmem:[%s280 + $0x50] sm:$0xff] %v799
      %832 = vst [vmem:[%s280 + $0x58] sm:$0xff] %v802
      %833 = vst [vmem:[%s280 + $0x60] sm:$0xff] %v807
      %834 = vst [vmem:[%s280 + $0x68] sm:$0xff] %v810
      %835 = vst [vmem:[%s280 + $0x70] sm:$0xff] %v815
      %836 = vst [vmem:[%s280 + $0x78] sm:$0xff] %v818
      %s837 = smul.u32 16, %s18
      %p838 = scmp.lt.s32.totalorder %s837, 31
      %s839 = scalar_select %p838, %s837, 31
      %s840 = smul.addr %s839, 8
      %s841 = scalar_lea.vmem %s7, %s840
      // Predicated region
      $region49: #{dual_qnetwork_forward.2} parent=47 // pred_check
        %p842 = pneg %p188
      $region50: #{dual_qnetwork_forward.2} parent=47 // pred_check_branch
        %844 = sbr.rel (%p842) target = $region52
      $region51: #{dual_qnetwork_forward.2} parent=47 // pred_region
        %s845 = smul.u32 16, %s18
      $region52: #{dual_qnetwork_forward.2} parent=47 // pred_fallthru
        _
    $region48: #{dual_qnetwork_forward.2} parent=5 // pred_fallthru
      _
    %p846 = scmp.le.s32.totalorder 2, %s13
    // Predicated region
    $region53: #{dual_qnetwork_forward.2} parent=5 // pred_check
      %p847 = pneg %p846
    $region54: #{dual_qnetwork_forward.2} parent=5 // pred_check_branch
      %849 = sbr.rel (%p847) target = $region56
    $region55: #{dual_qnetwork_forward.2} parent=5 // pred_region
      %s850 = ssub.s32 %s13, 2
      // Predicated region
      $region57: #{dual_qnetwork_forward.2} parent=55 // pred_check
        %p851 = pneg %p194
      $region58: #{dual_qnetwork_forward.2} parent=55 // pred_check_branch
        %853 = sbr.rel (%p851) target = $region60
      $region59: #{dual_qnetwork_forward.2} parent=55 // pred_region
        %s854 = smul.u32 16, %s19
        %p855 = scmp.lt.s32.totalorder %s854, 31
        %s856 = scalar_select %p855, %s854, 31
        %s857 = smul.addr %s856, 8
        %s858 = scalar_lea.vmem %s7, %s857
      $region60: #{dual_qnetwork_forward.2} parent=55 // pred_fallthru
        _
    $region56: #{dual_qnetwork_forward.2} parent=5 // pred_fallthru
      _
  $region6: #{dual_qnetwork_forward.2} parent=0 // loop_footer
    %s17 = sadd.s32 1, %s13
  $region7: #{dual_qnetwork_forward.2} parent=0 // loop_footer_branch
    %12 = sbr.rel target = $region3
  $region8: #{dual_qnetwork_forward.2} parent=0 // loop_exit
    _

</llo_original>
